<compile_context>
chip_gen: v7x
topology: tpu7x:2x2x1
jax: 0.10.0
libtpu: 0.0.40
codegen_flags: <defaults>
</compile_context>

<pallas_src>
import functools

import jax
import jax.numpy as jnp
from jax.experimental import pallas as pl
from jax.experimental.pallas import tpu as pltpu


def _link_attention_kernel(x_ref, w_ref, b_ref, m_ref, out_ref, a_ref, *,
                           mask_is_float):
    # Per-grid-step views (one block of Bt batch elements):
    #   x_ref  : (Bt, L, D) f32     w_ref : (D, H) f32    b_ref : (1, H) f32
    #   m_ref  : (Bt, H, L) float or int mask
    #   out_ref: (Bt, D) f32
    #   a_ref  : (Bt, H, L) f32, or (Bt*H, L) f32 when L % 128 == 0 (lane-dense)
    Bt, L, D = x_ref.shape
    H = w_ref.shape[1]

    x = x_ref[...]                                   # (Bt, L, D)
    w = w_ref[...]                                   # (D, H)
    b = b_ref[...]                                   # (1, H)
    m = m_ref[...]                                   # (Bt, H, L)
    keep = (m > 0.5) if mask_is_float else (m != 0)  # matches torch `masks > 0.5`

    # Query projection: one (Bt*L, D) @ (D, H) MXU matmul for the whole block.
    x2 = x.reshape(Bt * L, D)
    q2 = jnp.dot(x2, w, preferred_element_type=jnp.float32) + b   # (Bt*L, H)
    qt = jnp.transpose(q2.reshape(Bt, L, H), (0, 2, 1))           # (Bt, H, L)

    # Masked scores + exact softmax over the link dimension L.
    e = jnp.where(keep, qt, jnp.float32(-9.0e15))                 # (Bt, H, L)
    e_max = jnp.max(e, axis=-1, keepdims=True)
    p = jnp.exp(e - e_max)
    denom = jnp.sum(p, axis=-1, keepdims=True)                    # >= 1 always
    a = p / denom                                                 # exact divide
    a_ref[...] = a.reshape(a_ref.shape)

    # out[b, :] = sum_h (a[b,h,:] @ x[b,:,:]) = sum_l (sum_h a[b,h,l]) * x[b,l,:]
    # Head-sum on the small `a` tile, then a VPU broadcast-multiply + sublane
    # reduce (avoids Bt one-row M=1 MXU matmuls).
    asum = jnp.sum(a, axis=1)                                     # (Bt, L)
    out_ref[...] = jnp.sum(asum[:, :, None] * x, axis=1)          # (Bt, D)


def _block_vmem_bytes(bt, L, D, H, mask_itemsize):
    # Double-buffered per-step footprint: x block, mask block, a block, out block.
    per = bt * (4 * L * D + mask_itemsize * H * L + 4 * H * L + 4 * D)
    return 2 * per


def _pick_block_b(B, L, D, H, mask_itemsize, budget_bytes):
    """Largest sublane-aligned divisor of B that fits the VMEM budget."""
    if B % 8 != 0:
        # Fall back to a single full block so (Bt, D) / (Bt*H, L) output blocks
        # stay tile-legal (second-to-last dim equals the full array dim).
        return B
    divs = [d for d in range(B, 0, -1) if B % d == 0 and d % 8 == 0]
    fitting = [d for d in divs
               if _block_vmem_bytes(d, L, D, H, mask_itemsize) <= budget_bytes]
    if not fitting:
        return 8
    # Prefer keeping >= 2 grid steps (pipelining + megacore sharding).
    multi = [d for d in fitting if B // d >= 2]
    return multi[0] if multi else fitting[0]


def link_attention(x, masks, weight_dh, bias_h, *, block_b=None):
    """LinkAttention forward.

    x:         (B, L, D) float32
    masks:     (B, H, L); float (>0.5 = keep) or int/bool (nonzero = keep)
    weight_dh: (D, H)  (transposed vs PyTorch's (H, D) Linear weight)
    bias_h:    (H,)
    Returns (out: (B, D) f32, a: (B, H, L) f32).
    """
    B, L, D = x.shape
    H = weight_dh.shape[1]

    x = x.astype(jnp.float32)
    weight_dh = weight_dh.astype(jnp.float32)
    bias_2d = bias_h.reshape(1, H).astype(jnp.float32)

    # Masks stay in their native dtype (no separate cast pass over HBM);
    # the comparison happens in-kernel.  bool -> int8 only (1 byte either way).
    if masks.dtype == jnp.bool_:
        masks = masks.astype(jnp.int8)
    mask_is_float = bool(jnp.issubdtype(masks.dtype, jnp.floating))

    vmem_limit = 48 * 1024 * 1024        # safe on v5e/v6e (128 MiB) and v7x (64 MiB)
    block_budget = 32 * 1024 * 1024      # double-buffered per-step block budget
    if block_b is None:
        Bt = _pick_block_b(B, L, D, H, masks.dtype.itemsize, block_budget)
    else:
        Bt = block_b
        assert B % Bt == 0, "block_b must divide B (no padding pass)"
        assert Bt % 8 == 0 or Bt == B, "block_b must be a multiple of 8 or == B"
    n_blocks = B // Bt

    # Lane-dense `a` slab when the last dim is already a multiple of 128
    # (leading-dim merge only); otherwise keep the full (Bt, H, L) block to
    # avoid an in-kernel cross-lane relayout at small L.
    lane_dense_a = (L % 128 == 0)
    if lane_dense_a:
        a_shape = (B * H, L)
        a_spec = pl.BlockSpec((Bt * H, L), lambda i: (i, 0))
    else:
        a_shape = (B, H, L)
        a_spec = pl.BlockSpec((Bt, H, L), lambda i: (i, 0, 0))

    kernel = functools.partial(_link_attention_kernel, mask_is_float=mask_is_float)

    out, a_out = pl.pallas_call(
        kernel,
        out_shape=(
            jax.ShapeDtypeStruct((B, D), jnp.float32),
            jax.ShapeDtypeStruct(a_shape, jnp.float32),
        ),
        grid_spec=pltpu.PrefetchScalarGridSpec(
            num_scalar_prefetch=0,
            grid=(n_blocks,),
            in_specs=[
                pl.BlockSpec((Bt, L, D), lambda i: (i, 0, 0)),   # x block
                pl.BlockSpec((D, H), lambda i: (0, 0)),          # weight (resident)
                pl.BlockSpec((1, H), lambda i: (0, 0)),          # bias   (resident)
                pl.BlockSpec((Bt, H, L), lambda i: (i, 0, 0)),   # masks
            ],
            out_specs=[
                pl.BlockSpec((Bt, D), lambda i: (i, 0)),         # out (sublane-dense)
                a_spec,                                          # attention weights
            ],
        ),
        compiler_params=pltpu.CompilerParams(
            dimension_semantics=("parallel",),                   # megacore sharding
            vmem_limit_bytes=vmem_limit,
        ),
    )(x, weight_dh, bias_2d, masks)

    a = a_out.reshape(B, H, L)
    # Note: matches torch `.squeeze()` for B > 1 and D > 1.
    return out, a


def _reference(x, masks_f32, weight_dh, bias_h):
    q = jnp.einsum("bld,dh->blh", x, weight_dh) + bias_h         # (B, L, H)
    q = jnp.transpose(q, (0, 2, 1))                              # (B, H, L)
    e = jnp.where(masks_f32 > 0.5, q, jnp.float32(-9.0e15))
    a = jax.nn.softmax(e, axis=-1)
    out = jnp.einsum("bhl,bld->bhd", a, x)
    out = jnp.sum(out, axis=1)
    return out, a


if __name__ == "__main__":
    # Small deterministic shapes: batch=16, links=16, input_dim=32, n_heads=4.
    B, L, D, H = 16, 16, 32, 4
    key = jax.random.PRNGKey(0)
    kx, km, kw, kb = jax.random.split(key, 4)

    x = jax.random.normal(kx, (B, L, D), dtype=jnp.float32)
    masks_bool = jax.random.uniform(km, (B, H, L)) > 0.3
    masks_i8 = masks_bool.astype(jnp.int8)        # binary link mask (1 = keep)

    # Deterministic Linear(input_dim -> n_heads) init (PyTorch-style uniform bound).
    bound = 1.0 / jnp.sqrt(jnp.float32(D))
    weight_dh = jax.random.uniform(kw, (D, H), jnp.float32, -bound, bound)
    bias_h = jax.random.uniform(kb, (H,), jnp.float32, -bound, bound)

    out, a = link_attention(x, masks_i8, weight_dh, bias_h)
    jax.block_until_ready((out, a))

    out_ref, a_ref = _reference(x, masks_bool.astype(jnp.float32), weight_dh, bias_h)
    assert out.shape == (B, D) and a.shape == (B, H, L)
    assert jnp.allclose(out, out_ref, atol=1e-3, rtol=1e-3), "out mismatch"
    assert jnp.allclose(a, a_ref, atol=1e-3, rtol=1e-3), "attention mismatch"

    print("KERNEL_OK")
</pallas_src>

<mosaic_0001>
module attributes {stable_mosaic.version = 11 : i64} {
  func.func @_link_attention_kernel(%arg0: i32, %arg1: memref<8x16x32xf32, #tpu.memory_space<vmem>>, %arg2: memref<32x4xf32, #tpu.memory_space<vmem>>, %arg3: memref<1x4xf32, #tpu.memory_space<vmem>>, %arg4: memref<8x4x16xi8, #tpu.memory_space<vmem>>, %arg5: memref<8x32xf32, #tpu.memory_space<vmem>>, %arg6: memref<8x4x16xf32, #tpu.memory_space<vmem>>) attributes {dimension_semantics = [#tpu.dimension_semantics<parallel>], iteration_bounds = array<i64: 2>, scalar_prefetch = 0 : i64, scratch_operands = 0 : i64, tpu.core_type = #tpu.core_type<tc>, window_params = [{transform_indices = @transform_0, window_bounds = array<i64: 8, 16, 32>}, {pipeline_mode = #tpu.pipeline_mode<synchronous>, transform_indices = @transform_1, window_bounds = array<i64: 32, 4>}, {pipeline_mode = #tpu.pipeline_mode<synchronous>, transform_indices = @transform_2, window_bounds = array<i64: 1, 4>}, {transform_indices = @transform_3, window_bounds = array<i64: 8, 4, 16>}, {transform_indices = @transform_4, window_bounds = array<i64: 8, 32>}, {transform_indices = @transform_5, window_bounds = array<i64: 8, 4, 16>}]} {
    %c0 = arith.constant 0 : index
    %c0_0 = arith.constant 0 : index
    %c0_1 = arith.constant 0 : index
    %0 = vector.load %arg1[%c0, %c0_0, %c0_1] : memref<8x16x32xf32, #tpu.memory_space<vmem>>, vector<8x16x32xf32>
    %c0_2 = arith.constant 0 : index
    %c0_3 = arith.constant 0 : index
    %1 = vector.load %arg2[%c0_2, %c0_3] : memref<32x4xf32, #tpu.memory_space<vmem>>, vector<32x4xf32>
    %c0_4 = arith.constant 0 : index
    %c0_5 = arith.constant 0 : index
    %2 = vector.load %arg3[%c0_4, %c0_5] : memref<1x4xf32, #tpu.memory_space<vmem>>, vector<1x4xf32>
    %c0_6 = arith.constant 0 : index
    %c0_7 = arith.constant 0 : index
    %c0_8 = arith.constant 0 : index
    %3 = vector.load %arg4[%c0_6, %c0_7, %c0_8] : memref<8x4x16xi8, #tpu.memory_space<vmem>>, vector<8x4x16xi8>
    %c0_i8 = arith.constant 0 : i8
    %4 = vector.broadcast %c0_i8 : i8 to vector<8x4x16xi8>
    %5 = arith.cmpi ne, %3, %4 : vector<8x4x16xi8>
    %6 = vector.shape_cast %0 : vector<8x16x32xf32> to vector<128x32xf32>
    %cst = arith.constant dense<0.000000e+00> : vector<128x4xf32>
    %7 = tpu.matmul %6, %1, %cst {dimension_numbers = #tpu.dot_dimension_numbers<[1], [0], [0], [1], [0, 0, 1, 1], [], []>} : vector<128x32xf32>, vector<32x4xf32>, vector<128x4xf32> -> vector<128x4xf32>
    %8 = vector.broadcast %2 : vector<1x4xf32> to vector<128x4xf32>
    %9 = arith.addf %7, %8 : vector<128x4xf32>
    %10 = vector.shape_cast %9 : vector<128x4xf32> to vector<8x16x4xf32>
    %11 = tpu.transpose %10, [0, 2, 1] : vector<8x16x4xf32> -> vector<8x4x16xf32>
    %cst_9 = arith.constant -9.000000e+15 : f32
    %12 = vector.broadcast %cst_9 : f32 to vector<8x4x16xf32>
    %13 = arith.select %5, %11, %12 : vector<8x4x16xi1>, vector<8x4x16xf32>
    %cst_10 = arith.constant dense<0xFF800000> : vector<8x4xf32>
    %14 = vector.multi_reduction <maximumf>, %13, %cst_10 [2] : vector<8x4x16xf32> to vector<8x4xf32>
    %15 = vector.shape_cast %14 : vector<8x4xf32> to vector<8x4x1xf32>
    %16 = vector.broadcast %15 : vector<8x4x1xf32> to vector<8x4x16xf32>
    %17 = arith.subf %13, %16 : vector<8x4x16xf32>
    %18 = math.exp %17 : vector<8x4x16xf32>
    %cst_11 = arith.constant dense<0.000000e+00> : vector<8x4xf32>
    %19 = vector.multi_reduction <add>, %18, %cst_11 [2] : vector<8x4x16xf32> to vector<8x4xf32>
    %20 = vector.shape_cast %19 : vector<8x4xf32> to vector<8x4x1xf32>
    %21 = vector.broadcast %20 : vector<8x4x1xf32> to vector<8x4x16xf32>
    %22 = arith.divf %18, %21 : vector<8x4x16xf32>
    %c0_12 = arith.constant 0 : index
    %c0_13 = arith.constant 0 : index
    %c0_14 = arith.constant 0 : index
    %23 = vector.load %arg6[%c0_12, %c0_13, %c0_14] : memref<8x4x16xf32, #tpu.memory_space<vmem>>, vector<8x4x16xf32>
    tpu.vector_store %arg6[%c0_12, %c0_13, %c0_14], %22 {strides = array<i32>} : memref<8x4x16xf32, #tpu.memory_space<vmem>>, vector<8x4x16xf32>,
    %cst_15 = arith.constant dense<0.000000e+00> : vector<8x16xf32>
    %24 = vector.multi_reduction <add>, %22, %cst_15 [1] : vector<8x4x16xf32> to vector<8x16xf32>
    %25 = vector.shape_cast %24 : vector<8x16xf32> to vector<8x16x1xf32>
    %26 = vector.broadcast %25 : vector<8x16x1xf32> to vector<8x16x32xf32>
    %27 = arith.mulf %26, %0 : vector<8x16x32xf32>
    %cst_16 = arith.constant dense<0.000000e+00> : vector<8x32xf32>
    %28 = vector.multi_reduction <add>, %27, %cst_16 [1] : vector<8x16x32xf32> to vector<8x32xf32>
    %c0_17 = arith.constant 0 : index
    %c0_18 = arith.constant 0 : index
    %29 = vector.load %arg5[%c0_17, %c0_18] : memref<8x32xf32, #tpu.memory_space<vmem>>, vector<8x32xf32>
    tpu.vector_store %arg5[%c0_17, %c0_18], %28 {strides = array<i32>} : memref<8x32xf32, #tpu.memory_space<vmem>>, vector<8x32xf32>,
    return
  }
  func.func @transform_0(%arg0: i32) -> (i32, i32, i32) {
    %c0_i32 = arith.constant 0 : i32
    %c0_i32_0 = arith.constant 0 : i32
    %c0_i32_1 = arith.constant 0 : i32
    return %arg0, %c0_i32, %c0_i32_0 : i32, i32, i32
  }
  func.func @transform_1(%arg0: i32) -> (i32, i32) {
    %c0_i32 = arith.constant 0 : i32
    %c0_i32_0 = arith.constant 0 : i32
    %c0_i32_1 = arith.constant 0 : i32
    return %c0_i32, %c0_i32_0 : i32, i32
  }
  func.func @transform_2(%arg0: i32) -> (i32, i32) {
    %c0_i32 = arith.constant 0 : i32
    %c0_i32_0 = arith.constant 0 : i32
    %c0_i32_1 = arith.constant 0 : i32
    return %c0_i32, %c0_i32_0 : i32, i32
  }
  func.func @transform_3(%arg0: i32) -> (i32, i32, i32) {
    %c0_i32 = arith.constant 0 : i32
    %c0_i32_0 = arith.constant 0 : i32
    %c0_i32_1 = arith.constant 0 : i32
    return %arg0, %c0_i32, %c0_i32_0 : i32, i32, i32
  }
  func.func @transform_4(%arg0: i32) -> (i32, i32) {
    %c0_i32 = arith.constant 0 : i32
    %c0_i32_0 = arith.constant 0 : i32
    return %arg0, %c0_i32 : i32, i32
  }
  func.func @transform_5(%arg0: i32) -> (i32, i32, i32) {
    %c0_i32 = arith.constant 0 : i32
    %c0_i32_0 = arith.constant 0 : i32
    %c0_i32_1 = arith.constant 0 : i32
    return %arg0, %c0_i32, %c0_i32_0 : i32, i32, i32
  }
}

</mosaic_0001>

<llo_original>
// kernel: tpu_custom_call.1
$region0: #{tpu_custom_call.1}
  #allocation0 [shape = 'u32[]', space=smem, size = 0x4, offset = 0x4, fixed_abs, tag = 'smem constant byte address 0x4 - core index']
  #allocation1 [shape = 'u32[144,128]{1,0:T(1,128)}', space=vmem, size = 0x12000, scoped, tag = 'internal scratch']
  %s0 = inlined_call_operand.hbm [shape: f32[16,16,32], index: 0, kind: input, shape index: {}]
  %s1 = inlined_call_operand.vmem [shape: f32[32,4], index: 1, kind: input, shape index: {}]
  %s2 = inlined_call_operand.vmem [shape: f32[1,4], index: 2, kind: input, shape index: {}]
  %s3 = inlined_call_operand.vmem [shape: s8[16,4,16], index: 3, kind: input, shape index: {}]
  %s4 = inlined_call_operand.hbm [shape: f32[16,32], index: 4, kind: output, shape index: {0}]
  %s5 = inlined_call_operand.hbm [shape: f32[16,4,16], index: 5, kind: output, shape index: {1}]
  %6 = xla_tuple %s4, %s5
  %s7 = sld [smem:[#allocation0]]
  $region61: #{tpu_custom_call.1} parent=0
    _
  %s9 = ssub.s32 1, %s7
  %s10 = scalar_select 0, %s9, %s7
  $region1: #{tpu_custom_call.1} parent=0
    #allocation2 [shape = 'u8[131072]{0}', space=vmem, size = 0x20000, scoped, tag = 'input window, operand 0']
    #allocation3 [shape = 's32[2]{0}', space=sflag, size = 0x8, scoped, tag = 'scoped memory for tpu_custom_call.1']
    #allocation4 [shape = 's32[2]{0}', space=sflag, size = 0x8, scoped, tag = 'scoped memory for tpu_custom_call.1']
    #allocation5 [shape = 'u8[8192]{0}', space=vmem, size = 0x2000, scoped, tag = 'output window, operand 0']
    #allocation6 [shape = 'u8[32768]{0}', space=vmem, size = 0x8000, scoped, tag = 'output window, operand 1']
    #allocation7 [shape = 's32[2]{0}', space=sflag, size = 0x8, scoped, tag = 'scoped memory for tpu_custom_call.1']
    %11 = vsyncpa [#allocation3], 0
    %s12 = scalar_lea.sflag [#allocation3], 1
    %13 = vsyncpa %s12, 0
    %14 = vsyncpa [#allocation4], 0
    %s15 = scalar_lea.sflag [#allocation4], 1
    %16 = vsyncpa %s15, 0
    %17 = vsyncpa [#allocation7], 0
    %s18 = scalar_lea.sflag [#allocation7], 1
    %19 = vsyncpa %s18, 0
    loop: start=0, step=1, limit=4
    $region2: #{tpu_custom_call.1} parent=1 // loop_pre_header
      _
    $region3: #{tpu_custom_call.1} parent=1 // loop_header
      %s21 = sphi 0, %s25
      %p22 = scmp.ge.s32.totalorder %s21, 4
      %s31 = sphi 0, %s33
      %s34 = sphi 0, %s31
      %s35 = sphi 0, %s34
      %s51 = sphi 0, %s35
      %s55 = sphi 0, %s55
      %s57 = sphi 0, %s55
      %s58 = sphi 0, %s57
      %s72 = sphi 0, %s58
      %s76 = sphi 0, %s76
      %s78 = sphi 0, %s76
      %s79 = sphi 0, %s78
      %s93 = sphi 0, %s79
      %s99 = sphi 0, %s101
      %s102 = sphi 0, %s99
      %s103 = sphi 0, %s102
      %s119 = sphi 0, %s103
      %s125 = sphi 0, %s127
      %s128 = sphi 0, %s125
      %s129 = sphi 0, %s128
      %s145 = sphi 0, %s129
      %s151 = sphi 0, %s153
      %s154 = sphi 0, %s151
      %s155 = sphi 0, %s154
      %s171 = sphi 0, %s155
    $region4: #{tpu_custom_call.1} parent=1 // loop_header_branch
      %24 = sbr.rel (%p22) target = $region8
    $region5: #{tpu_custom_call.1} parent=1 // loop_body
      %s26 = ssub.s32 %s21, 1
      %s27 = ssub.s32 %s21, 2
      %s28 = sadd.s32 %s21, 1
      %s29 = ssub.s32 %s21, %s28
      %p30 = scmp.eq.s32.totalorder %s29, 0
      %s32 = sadd.s32 %s31, 1
      %s33 = scalar_select %p30, %s31, %s32
      %p36 = pneg %p30
      %p37 = scmp.eq.s32.totalorder %s21, 1
      %p38 = por %p36, %p37
      %p39 = scmp.ne.s32.totalorder %s31, %s34
      %p40 = scmp.eq.s32.totalorder %s21, 0
      %p41 = por %p39, %p40
      %p42 = scmp.ne.s32.totalorder %s31, %s34
      %p43 = scmp.eq.s32.totalorder %s26, 1
      %p44 = por %p42, %p43
      %p45 = scmp.ne.s32.totalorder %s34, %s35
      %p46 = scmp.eq.s32.totalorder %s26, 0
      %p47 = por %p45, %p46
      %p48 = scmp.ne.s32.totalorder %s34, %s35
      %p49 = scmp.eq.s32.totalorder %s27, 1
      %p50 = por %p48, %p49
      %p52 = scmp.ne.s32.totalorder %s35, %s51
      %p53 = scmp.eq.s32.totalorder %s27, 0
      %p54 = por %p52, %p53
      %s56 = sadd.s32 %s55, 1
      %p59 = scmp.eq.s32.totalorder %s21, 1
      %p60 = scmp.ne.s32.totalorder %s55, %s57
      %p61 = scmp.eq.s32.totalorder %s21, 0
      %p62 = por %p60, %p61
      %p63 = scmp.ne.s32.totalorder %s55, %s57
      %p64 = scmp.eq.s32.totalorder %s26, 1
      %p65 = por %p63, %p64
      %p66 = scmp.ne.s32.totalorder %s57, %s58
      %p67 = scmp.eq.s32.totalorder %s26, 0
      %p68 = por %p66, %p67
      %p69 = scmp.ne.s32.totalorder %s57, %s58
      %p70 = scmp.eq.s32.totalorder %s27, 1
      %p71 = por %p69, %p70
      %p73 = scmp.ne.s32.totalorder %s58, %s72
      %p74 = scmp.eq.s32.totalorder %s27, 0
      %p75 = por %p73, %p74
      %s77 = sadd.s32 %s76, 1
      %p80 = scmp.eq.s32.totalorder %s21, 1
      %p81 = scmp.ne.s32.totalorder %s76, %s78
      %p82 = scmp.eq.s32.totalorder %s21, 0
      %p83 = por %p81, %p82
      %p84 = scmp.ne.s32.totalorder %s76, %s78
      %p85 = scmp.eq.s32.totalorder %s26, 1
      %p86 = por %p84, %p85
      %p87 = scmp.ne.s32.totalorder %s78, %s79
      %p88 = scmp.eq.s32.totalorder %s26, 0
      %p89 = por %p87, %p88
      %p90 = scmp.ne.s32.totalorder %s78, %s79
      %p91 = scmp.eq.s32.totalorder %s27, 1
      %p92 = por %p90, %p91
      %p94 = scmp.ne.s32.totalorder %s79, %s93
      %p95 = scmp.eq.s32.totalorder %s27, 0
      %p96 = por %p94, %p95
      %s97 = ssub.s32 %s21, %s28
      %p98 = scmp.eq.s32.totalorder %s97, 0
      %s100 = sadd.s32 %s99, 1
      %s101 = scalar_select %p98, %s99, %s100
      %p104 = pneg %p98
      %p105 = scmp.eq.s32.totalorder %s21, 1
      %p106 = por %p104, %p105
      %p107 = scmp.ne.s32.totalorder %s99, %s102
      %p108 = scmp.eq.s32.totalorder %s21, 0
      %p109 = por %p107, %p108
      %p110 = scmp.ne.s32.totalorder %s99, %s102
      %p111 = scmp.eq.s32.totalorder %s26, 1
      %p112 = por %p110, %p111
      %p113 = scmp.ne.s32.totalorder %s102, %s103
      %p114 = scmp.eq.s32.totalorder %s26, 0
      %p115 = por %p113, %p114
      %p116 = scmp.ne.s32.totalorder %s102, %s103
      %p117 = scmp.eq.s32.totalorder %s27, 1
      %p118 = por %p116, %p117
      %p120 = scmp.ne.s32.totalorder %s103, %s119
      %p121 = scmp.eq.s32.totalorder %s27, 0
      %p122 = por %p120, %p121
      %s123 = ssub.s32 %s21, %s28
      %p124 = scmp.eq.s32.totalorder %s123, 0
      %s126 = sadd.s32 %s125, 1
      %s127 = scalar_select %p124, %s125, %s126
      %p130 = pneg %p124
      %p131 = scmp.eq.s32.totalorder %s21, 1
      %p132 = por %p130, %p131
      %p133 = scmp.ne.s32.totalorder %s125, %s128
      %p134 = scmp.eq.s32.totalorder %s21, 0
      %p135 = por %p133, %p134
      %p136 = scmp.ne.s32.totalorder %s125, %s128
      %p137 = scmp.eq.s32.totalorder %s26, 1
      %p138 = por %p136, %p137
      %p139 = scmp.ne.s32.totalorder %s128, %s129
      %p140 = scmp.eq.s32.totalorder %s26, 0
      %p141 = por %p139, %p140
      %p142 = scmp.ne.s32.totalorder %s128, %s129
      %p143 = scmp.eq.s32.totalorder %s27, 1
      %p144 = por %p142, %p143
      %p146 = scmp.ne.s32.totalorder %s129, %s145
      %p147 = scmp.eq.s32.totalorder %s27, 0
      %p148 = por %p146, %p147
      %s149 = ssub.s32 %s21, %s28
      %p150 = scmp.eq.s32.totalorder %s149, 0
      %s152 = sadd.s32 %s151, 1
      %s153 = scalar_select %p150, %s151, %s152
      %p156 = pneg %p150
      %p157 = scmp.eq.s32.totalorder %s21, 1
      %p158 = por %p156, %p157
      %p159 = scmp.ne.s32.totalorder %s151, %s154
      %p160 = scmp.eq.s32.totalorder %s21, 0
      %p161 = por %p159, %p160
      %p162 = scmp.ne.s32.totalorder %s151, %s154
      %p163 = scmp.eq.s32.totalorder %s26, 1
      %p164 = por %p162, %p163
      %p165 = scmp.ne.s32.totalorder %s154, %s155
      %p166 = scmp.eq.s32.totalorder %s26, 0
      %p167 = por %p165, %p166
      %p168 = scmp.ne.s32.totalorder %s154, %s155
      %p169 = scmp.eq.s32.totalorder %s27, 1
      %p170 = por %p168, %p169
      %p172 = scmp.ne.s32.totalorder %s155, %s171
      %p173 = scmp.eq.s32.totalorder %s27, 0
      %p174 = por %p172, %p173
      %p175 = scmp.le.s32.totalorder 1, %s21
      %p176 = scmp.lt.s32.totalorder %s21, 3
      %p177 = pnand %p175, %p176
      %p178 = pneg %p177
      // Predicated region
      $region9: #{tpu_custom_call.1} parent=5 // pred_check
        _
      $region10: #{tpu_custom_call.1} parent=5 // pred_check_branch
        %180 = sbr.rel (%p177) target = $region12
      $region11: #{tpu_custom_call.1} parent=5 // pred_region
        %s181 = ssub.s32 %s21, 1
        // Predicated region
        $region13: #{tpu_custom_call.1} parent=11 // pred_check
          %p182 = pneg %p68
        $region14: #{tpu_custom_call.1} parent=11 // pred_check_branch
          %184 = sbr.rel (%p182) target = $region16
        $region15: #{tpu_custom_call.1} parent=11 // pred_region
          _
        $region16: #{tpu_custom_call.1} parent=11 // pred_fallthru
          _
        // Predicated region
        $region17: #{tpu_custom_call.1} parent=11 // pred_check
          %p185 = pneg %p89
        $region18: #{tpu_custom_call.1} parent=11 // pred_check_branch
          %187 = sbr.rel (%p185) target = $region20
        $region19: #{tpu_custom_call.1} parent=11 // pred_region
          _
        $region20: #{tpu_custom_call.1} parent=11 // pred_fallthru
          _
      $region12: #{tpu_custom_call.1} parent=5 // pred_fallthru
        _
      %p188 = scmp.lt.s32.totalorder %s21, 2
      // Predicated region
      $region21: #{tpu_custom_call.1} parent=5 // pred_check
        %p189 = pneg %p188
      $region22: #{tpu_custom_call.1} parent=5 // pred_check_branch
        %191 = sbr.rel (%p189) target = $region24
      $region23: #{tpu_custom_call.1} parent=5 // pred_region
        // Predicated region
        $region25: #{tpu_custom_call.1} parent=23 // pred_check
          %p192 = pneg %p41
        $region26: #{tpu_custom_call.1} parent=23 // pred_check_branch
          %194 = sbr.rel (%p192) target = $region28
        $region27: #{tpu_custom_call.1} parent=23 // pred_region
          %s195 = sand.u32 %s31, 1
          %s196 = scalar_lea.sflag [#allocation3], %s195
          %s197 = sand.u32 %s31, 1
          %s198 = smul.addr %s197, 128
          %s199 = scalar_lea.vmem [#allocation2], %s198
          %s200 = smul.u32 8, %s21
          %s202 = ssub.s32 2048, 2048
          %203 = vsyncadd %s196, %s202
          %s204 = smul.addr %s200, 2
          %s205 = smul.addr %s204, 128
          %s206 = scalar_lea.hbm %s0, %s205
          %s207 = sshll.u32 %s199, 4
          %s208 = int_to_ptr.vmem [resolvable:$true] %s207
          %213 = dma.hbm_to_vmem [thread:$0]  %s206, 2048, %s208, %s196, 128, 128, 8
        $region28: #{tpu_custom_call.1} parent=23 // pred_fallthru
          _
        // Predicated region
        $region29: #{tpu_custom_call.1} parent=23 // pred_check
          %p214 = pneg %p109
        $region30: #{tpu_custom_call.1} parent=23 // pred_check_branch
          %216 = sbr.rel (%p214) target = $region32
        $region31: #{tpu_custom_call.1} parent=23 // pred_region
          %s217 = smul.u32 8, %s21
          %p218 = scmp.lt.s32.totalorder %s217, 15
          %s219 = scalar_select %p218, %s217, 15
          %s220 = scalar_lea.vmem %s3, %s219
          %s221 = smul.u32 8, %s21
        $region32: #{tpu_custom_call.1} parent=23 // pred_fallthru
          _
      $region24: #{tpu_custom_call.1} parent=5 // pred_fallthru
        _
      %p222 = scmp.le.s32.totalorder 1, %s21
      %p223 = scmp.lt.s32.totalorder %s21, 3
      %p224 = pnand %p222, %p223
      %p225 = pneg %p224
      // Predicated region
      $region33: #{tpu_custom_call.1} parent=5 // pred_check
        _
      $region34: #{tpu_custom_call.1} parent=5 // pred_check_branch
        %227 = sbr.rel (%p224) target = $region36
      $region35: #{tpu_custom_call.1} parent=5 // pred_region
        %s228 = ssub.s32 %s21, 1
        %s229 = sand.u32 %s34, 1
        %s230 = scalar_lea.sflag [#allocation3], %s229
        %s231 = sand.u32 %s34, 1
        %s232 = smul.addr %s231, 128
        %s233 = scalar_lea.vmem [#allocation2], %s232
        // Predicated region
        $region37: #{tpu_custom_call.1} parent=35 // pred_check
          %p234 = pneg %p47
        $region38: #{tpu_custom_call.1} parent=35 // pred_check_branch
          %236 = sbr.rel (%p234) target = $region40
        $region39: #{tpu_custom_call.1} parent=35 // pred_region
          %237 = dma.done %s230, 2048
        $region40: #{tpu_custom_call.1} parent=35 // pred_fallthru
          _
        %s238 = sand.u32 %s34, 1
        %s239 = scalar_lea.sflag [#allocation3], %s238
        %s240 = sand.u32 %s34, 1
        %s241 = smul.addr %s240, 128
        %s242 = scalar_lea.vmem [#allocation2], %s241
        %p243 = pneg %p47
        %p244 = pneg %p44
        %p245 = pneg %p68
        %p246 = pneg %p65
        %p247 = pneg %p89
        %p248 = pneg %p86
        %s249 = smul.u32 8, %s26
        %p250 = scmp.lt.s32.totalorder %s249, 15
        %s251 = scalar_select %p250, %s249, 15
        %s252 = scalar_lea.vmem %s3, %s251
        %p253 = pneg %p115
        %p254 = pneg %p112
        %p255 = pneg %p141
        %p256 = pneg %p138
        %s257 = sand.u32 %s128, 1
        %s258 = scalar_lea.sflag [#allocation4], %s257
        %s259 = sand.u32 %s128, 1
        %s260 = smul.addr %s259, 8
        %s261 = scalar_lea.vmem [#allocation5], %s260
        %p262 = pneg %p167
        %p263 = pneg %p164
        %s264 = sand.u32 %s154, 1
        %s265 = scalar_lea.sflag [#allocation7], %s264
        %s266 = sand.u32 %s154, 1
        %s267 = smul.addr %s266, 32
        %s268 = scalar_lea.vmem [#allocation6], %s267
        %s269 = smul.u32 8, %s26
        %s270 = smul.u32 8, %s26
        %p271 = scmp.lt.s32.totalorder %s270, 15
        %s272 = scalar_select %p271, %s270, 15
        %s273 = scalar_lea.vmem %s3, %s272
        %s274 = smul.u32 8, %s26
        %s275 = smul.u32 8, %s26
        %v278 = vld [vmem:[%s233] sm:$0xff]
        %v279 = vld [vmem:[%s233 + $0x8] sm:$0xff]
        %v280 = vld [vmem:[%s233 + $0x10] sm:$0xff]
        %v281 = vld [vmem:[%s233 + $0x18] sm:$0xff]
        %v282 = vld [vmem:[%s233 + $0x20] sm:$0xff]
        %v283 = vld [vmem:[%s233 + $0x28] sm:$0xff]
        %v284 = vld [vmem:[%s233 + $0x30] sm:$0xff]
        %v285 = vld [vmem:[%s233 + $0x38] sm:$0xff]
        %v286 = vld [vmem:[%s233 + $0x40] sm:$0xff]
        %v287 = vld [vmem:[%s233 + $0x48] sm:$0xff]
        %v288 = vld [vmem:[%s233 + $0x50] sm:$0xff]
        %v289 = vld [vmem:[%s233 + $0x58] sm:$0xff]
        %v290 = vld [vmem:[%s233 + $0x60] sm:$0xff]
        %v291 = vld [vmem:[%s233 + $0x68] sm:$0xff]
        %v292 = vld [vmem:[%s233 + $0x70] sm:$0xff]
        %v293 = vld [vmem:[%s233 + $0x78] sm:$0xff]
        %v294 = vld [vmem:[%s1] sm:$0xff]
        %v295 = vld [vmem:[%s1 + $0x8] sm:$0xff]
        %v296 = vld [vmem:[%s1 + $0x10] sm:$0xff]
        %v297 = vld [vmem:[%s1 + $0x18] sm:$0xff]
        %v298 = vld [vmem:[%s2] sm:$0x1]
        %v299 = vld [vmem:[%s273] sm:$0x1]
        %v300 = vld [vmem:[%s273 + $0x1] sm:$0x1]
        %v301 = vld [vmem:[%s273 + $0x2] sm:$0x1]
        %v302 = vld [vmem:[%s273 + $0x3] sm:$0x1]
        %v303 = vld [vmem:[%s273 + $0x4] sm:$0x1]
        %v304 = vld [vmem:[%s273 + $0x5] sm:$0x1]
        %v305 = vld [vmem:[%s273 + $0x6] sm:$0x1]
        %v306 = vld [vmem:[%s273 + $0x7] sm:$0x1]
        %vm307 = vnez %v299
        %vm308 = vnez %v300
        %vm309 = vnez %v301
        %vm310 = vnez %v302
        %vm311 = vnez %v303
        %vm312 = vnez %v304
        %vm313 = vnez %v305
        %vm314 = vnez %v306
        %v316 = vlaneseq
        %v317 = vshrl.u32 %v316, 7
        %v318 = vsub.s32 0, %v317
        %v319 = vrot.slane %v298, %v318
        %vm321 = vcmask 261120
        %v323 = vsel %vm321, %v278, 0
        %v326 = vsel %vm321, %v279, 0
        %v329 = vsel %vm321, %v280, 0
        %v332 = vsel %vm321, %v281, 0
        %v335 = vsel %vm321, %v282, 0
        %v338 = vsel %vm321, %v283, 0
        %v341 = vsel %vm321, %v284, 0
        %v344 = vsel %vm321, %v285, 0
        %v347 = vsel %vm321, %v286, 0
        %v350 = vsel %vm321, %v287, 0
        %v353 = vsel %vm321, %v288, 0
        %v356 = vsel %vm321, %v289, 0
        %v359 = vsel %vm321, %v290, 0
        %v362 = vsel %vm321, %v291, 0
        %v365 = vsel %vm321, %v292, 0
        %v368 = vsel %vm321, %v293, 0
        %370 = vmatprep.subr.mxu0 0.0
        %371 = vmatpush1.msra.mxu0 %v294
        %372 = vmatprep.subr.mxu0 0.0
        %373 = vmatpush1.msra.mxu0 %v295
        %374 = vmatprep.subr.mxu0 0.0
        %375 = vmatpush1.msra.mxu0 %v296
        %376 = vmatprep.subr.mxu0 0.0
        %377 = vmatpush1.msra.mxu0 %v297
        %378 = vmatprep.subr.mxu0 0.0
        %379 = vmatpush1.msra.mxu0 0.0
        %380 = vmatprep.subr.mxu0 0.0
        %381 = vmatpush1.msra.mxu0 0.0
        %382 = vmatprep.subr.mxu0 0.0
        %383 = vmatpush1.msra.mxu0 0.0
        %384 = vmatprep.subr.mxu0 0.0
        %385 = vmatpush1.msra.mxu0 0.0
        %386 = vmatprep.subr.mxu0 0.0
        %387 = vmatpush1.msra.mxu0 0.0
        %388 = vmatprep.subr.mxu0 0.0
        %389 = vmatpush1.msra.mxu0 0.0
        %390 = vmatprep.subr.mxu0 0.0
        %391 = vmatpush1.msra.mxu0 0.0
        %392 = vmatprep.subr.mxu0 0.0
        %393 = vmatpush1.msra.mxu0 0.0
        %394 = vmatprep.subr.mxu0 0.0
        %395 = vmatpush1.msra.mxu0 0.0
        %396 = vmatprep.subr.mxu0 0.0
        %397 = vmatpush1.msra.mxu0 0.0
        %398 = vmatprep.subr.mxu0 0.0
        %399 = vmatpush1.msra.mxu0 0.0
        %400 = vmatprep.subr.mxu0 0.0
        %401 = vmatpush1.msra.mxu0 0.0
        %402 = vmatprep.subr.mxu0 0.0
        %403 = vmatpush1.msra.mxu0 0.0
        %404 = vmatprep.subr.mxu0 0.0
        %405 = vmatpush1.msra.mxu0 0.0
        %406 = vmatprep.subr.mxu0 0.0
        %407 = vmatpush1.msra.mxu0 0.0
        %408 = vmatprep.subr.mxu0 0.0
        %409 = vmatpush1.msra.mxu0 0.0
        %410 = vmatprep.subr.mxu0 0.0
        %411 = vmatpush1.msra.mxu0 0.0
        %412 = vmatprep.subr.mxu0 0.0
        %413 = vmatpush1.msra.mxu0 0.0
        %414 = vmatprep.subr.mxu0 0.0
        %415 = vmatpush1.msra.mxu0 0.0
        %416 = vmatprep.subr.mxu0 0.0
        %417 = vmatpush1.msra.mxu0 0.0
        %418 = vmatprep.subr.mxu0 0.0
        %419 = vmatpush1.msra.mxu0 0.0
        %420 = vmatprep.subr.mxu0 0.0
        %421 = vmatpush1.msra.mxu0 0.0
        %422 = vmatprep.subr.mxu0 0.0
        %423 = vmatpush1.msra.mxu0 0.0
        %424 = vmatprep.subr.mxu0 0.0
        %425 = vmatpush1.msra.mxu0 0.0
        %426 = vmatprep.subr.mxu0 0.0
        %427 = vmatpush1.msra.mxu0 0.0
        %428 = vmatprep.subr.mxu0 0.0
        %429 = vmatpush1.msra.mxu0 0.0
        %430 = vmatprep.subr.mxu0 0.0
        %431 = vmatpush1.msra.mxu0 0.0
        %432 = vmatprep.subr.mxu0 0.0
        %433 = vmatpush1.msra.mxu0 0.0
        %434 = vmatprep.mubr.f32.mxu0 0.0
        %435 = vmatmul.mubr.f32.gmra.mrb[0].mxu0 %v323
        %v436 = vpop.f32.mrb[0].mxu0
        %v437 = vadd.f32 %v319, %v436
        %v438 = vpop.f32.mrb[0].mxu0
        %439 = vmatprep.mubr.f32.mxu0 0.0
        %440 = vmatmul.mubr.f32.gmra.mrb[0].mxu0 %v326
        %v441 = vpop.f32.mrb[0].mxu0
        %v442 = vadd.f32 %v319, %v441
        %v443 = vpop.f32.mrb[0].mxu0
        %444 = vmatprep.mubr.f32.mxu0 0.0
        %445 = vmatmul.mubr.f32.gmra.mrb[0].mxu0 %v329
        %v446 = vpop.f32.mrb[0].mxu0
        %v447 = vadd.f32 %v319, %v446
        %v448 = vpop.f32.mrb[0].mxu0
        %449 = vmatprep.mubr.f32.mxu0 0.0
        %450 = vmatmul.mubr.f32.gmra.mrb[0].mxu0 %v332
        %v451 = vpop.f32.mrb[0].mxu0
        %v452 = vadd.f32 %v319, %v451
        %v453 = vpop.f32.mrb[0].mxu0
        %454 = vmatprep.mubr.f32.mxu0 0.0
        %455 = vmatmul.mubr.f32.gmra.mrb[0].mxu0 %v335
        %v456 = vpop.f32.mrb[0].mxu0
        %v457 = vadd.f32 %v319, %v456
        %v458 = vpop.f32.mrb[0].mxu0
        %459 = vmatprep.mubr.f32.mxu0 0.0
        %460 = vmatmul.mubr.f32.gmra.mrb[0].mxu0 %v338
        %v461 = vpop.f32.mrb[0].mxu0
        %v462 = vadd.f32 %v319, %v461
        %v463 = vpop.f32.mrb[0].mxu0
        %464 = vmatprep.mubr.f32.mxu0 0.0
        %465 = vmatmul.mubr.f32.gmra.mrb[0].mxu0 %v341
        %v466 = vpop.f32.mrb[0].mxu0
        %v467 = vadd.f32 %v319, %v466
        %v468 = vpop.f32.mrb[0].mxu0
        %469 = vmatprep.mubr.f32.mxu0 0.0
        %470 = vmatmul.mubr.f32.gmra.mrb[0].mxu0 %v344
        %v471 = vpop.f32.mrb[0].mxu0
        %v472 = vadd.f32 %v319, %v471
        %v473 = vpop.f32.mrb[0].mxu0
        %474 = vmatprep.mubr.f32.mxu0 0.0
        %475 = vmatmul.mubr.f32.gmra.mrb[0].mxu0 %v347
        %v476 = vpop.f32.mrb[0].mxu0
        %v477 = vadd.f32 %v319, %v476
        %v478 = vpop.f32.mrb[0].mxu0
        %479 = vmatprep.mubr.f32.mxu0 0.0
        %480 = vmatmul.mubr.f32.gmra.mrb[0].mxu0 %v350
        %v481 = vpop.f32.mrb[0].mxu0
        %v482 = vadd.f32 %v319, %v481
        %v483 = vpop.f32.mrb[0].mxu0
        %484 = vmatprep.mubr.f32.mxu0 0.0
        %485 = vmatmul.mubr.f32.gmra.mrb[0].mxu0 %v353
        %v486 = vpop.f32.mrb[0].mxu0
        %v487 = vadd.f32 %v319, %v486
        %v488 = vpop.f32.mrb[0].mxu0
        %489 = vmatprep.mubr.f32.mxu0 0.0
        %490 = vmatmul.mubr.f32.gmra.mrb[0].mxu0 %v356
        %v491 = vpop.f32.mrb[0].mxu0
        %v492 = vadd.f32 %v319, %v491
        %v493 = vpop.f32.mrb[0].mxu0
        %494 = vmatprep.mubr.f32.mxu0 0.0
        %495 = vmatmul.mubr.f32.gmra.mrb[0].mxu0 %v359
        %v496 = vpop.f32.mrb[0].mxu0
        %v497 = vadd.f32 %v319, %v496
        %v498 = vpop.f32.mrb[0].mxu0
        %499 = vmatprep.mubr.f32.mxu0 0.0
        %500 = vmatmul.mubr.f32.gmra.mrb[0].mxu0 %v362
        %v501 = vpop.f32.mrb[0].mxu0
        %v502 = vadd.f32 %v319, %v501
        %v503 = vpop.f32.mrb[0].mxu0
        %504 = vmatprep.mubr.f32.mxu0 0.0
        %505 = vmatmul.mubr.f32.gmra.mrb[0].mxu0 %v365
        %v506 = vpop.f32.mrb[0].mxu0
        %v507 = vadd.f32 %v319, %v506
        %v508 = vpop.f32.mrb[0].mxu0
        %509 = vmatprep.mubr.f32.mxu0 0.0
        %510 = vmatmul.mubr.f32.gmra.mrb[0].mxu0 %v368
        %v511 = vpop.f32.mrb[0].mxu0
        %v512 = vadd.f32 %v319, %v511
        %v513 = vpop.f32.mrb[0].mxu0
        %514 = vdwg.mxu0
        %515 = vxpose.xlu0.b32.start [1/16] %v437, 128
        %516 = vxpose.xlu0.b32.cont [2/16] %v442, 128
        %517 = vxpose.xlu0.b32.cont [3/16] 0.0, 128
        %518 = vxpose.xlu0.b32.cont [4/16] 0.0, 128
        %519 = vxpose.xlu0.b32.cont [5/16] 0.0, 128
        %520 = vxpose.xlu0.b32.cont [6/16] 0.0, 128
        %521 = vxpose.xlu0.b32.cont [7/16] 0.0, 128
        %522 = vxpose.xlu0.b32.cont [8/16] 0.0, 128
        %523 = vxpose.xlu0.b32.cont [9/16] 0.0, 128
        %524 = vxpose.xlu0.b32.cont [10/16] 0.0, 128
        %525 = vxpose.xlu0.b32.cont [11/16] 0.0, 128
        %526 = vxpose.xlu0.b32.cont [12/16] 0.0, 128
        %527 = vxpose.xlu0.b32.cont [13/16] 0.0, 128
        %528 = vxpose.xlu0.b32.cont [14/16] 0.0, 128
        %529 = vxpose.xlu0.b32.cont [15/16] 0.0, 128
        %530 = vxpose.xlu0.b32.end [16/16] 0.0, 128
        %v531 = vpop.trf.xlu0
        %v532 = vpop.trf.xlu0
        %v533 = vpop.trf.xlu0
        %v534 = vpop.trf.xlu0
        %v535 = vpop.trf.xlu0
        %v536 = vpop.trf.xlu0
        %v537 = vpop.trf.xlu0
        %v538 = vpop.trf.xlu0
        %v539 = vpop.trf.xlu0
        %v540 = vpop.trf.xlu0
        %v541 = vpop.trf.xlu0
        %v542 = vpop.trf.xlu0
        %v543 = vpop.trf.xlu0
        %v544 = vpop.trf.xlu0
        %v545 = vpop.trf.xlu0
        %v546 = vpop.trf.xlu0
        %547 = vxpose.xlu0.b32.start [1/16] %v447, 128
        %548 = vxpose.xlu0.b32.cont [2/16] %v452, 128
        %549 = vxpose.xlu0.b32.cont [3/16] 0.0, 128
        %550 = vxpose.xlu0.b32.cont [4/16] 0.0, 128
        %551 = vxpose.xlu0.b32.cont [5/16] 0.0, 128
        %552 = vxpose.xlu0.b32.cont [6/16] 0.0, 128
        %553 = vxpose.xlu0.b32.cont [7/16] 0.0, 128
        %554 = vxpose.xlu0.b32.cont [8/16] 0.0, 128
        %555 = vxpose.xlu0.b32.cont [9/16] 0.0, 128
        %556 = vxpose.xlu0.b32.cont [10/16] 0.0, 128
        %557 = vxpose.xlu0.b32.cont [11/16] 0.0, 128
        %558 = vxpose.xlu0.b32.cont [12/16] 0.0, 128
        %559 = vxpose.xlu0.b32.cont [13/16] 0.0, 128
        %560 = vxpose.xlu0.b32.cont [14/16] 0.0, 128
        %561 = vxpose.xlu0.b32.cont [15/16] 0.0, 128
        %562 = vxpose.xlu0.b32.end [16/16] 0.0, 128
        %v563 = vpop.trf.xlu0
        %v564 = vpop.trf.xlu0
        %v565 = vpop.trf.xlu0
        %v566 = vpop.trf.xlu0
        %v567 = vpop.trf.xlu0
        %v568 = vpop.trf.xlu0
        %v569 = vpop.trf.xlu0
        %v570 = vpop.trf.xlu0
        %v571 = vpop.trf.xlu0
        %v572 = vpop.trf.xlu0
        %v573 = vpop.trf.xlu0
        %v574 = vpop.trf.xlu0
        %v575 = vpop.trf.xlu0
        %v576 = vpop.trf.xlu0
        %v577 = vpop.trf.xlu0
        %v578 = vpop.trf.xlu0
        %579 = vxpose.xlu0.b32.start [1/16] %v457, 128
        %580 = vxpose.xlu0.b32.cont [2/16] %v462, 128
        %581 = vxpose.xlu0.b32.cont [3/16] 0.0, 128
        %582 = vxpose.xlu0.b32.cont [4/16] 0.0, 128
        %583 = vxpose.xlu0.b32.cont [5/16] 0.0, 128
        %584 = vxpose.xlu0.b32.cont [6/16] 0.0, 128
        %585 = vxpose.xlu0.b32.cont [7/16] 0.0, 128
        %586 = vxpose.xlu0.b32.cont [8/16] 0.0, 128
        %587 = vxpose.xlu0.b32.cont [9/16] 0.0, 128
        %588 = vxpose.xlu0.b32.cont [10/16] 0.0, 128
        %589 = vxpose.xlu0.b32.cont [11/16] 0.0, 128
        %590 = vxpose.xlu0.b32.cont [12/16] 0.0, 128
        %591 = vxpose.xlu0.b32.cont [13/16] 0.0, 128
        %592 = vxpose.xlu0.b32.cont [14/16] 0.0, 128
        %593 = vxpose.xlu0.b32.cont [15/16] 0.0, 128
        %594 = vxpose.xlu0.b32.end [16/16] 0.0, 128
        %v595 = vpop.trf.xlu0
        %v596 = vpop.trf.xlu0
        %v597 = vpop.trf.xlu0
        %v598 = vpop.trf.xlu0
        %v599 = vpop.trf.xlu0
        %v600 = vpop.trf.xlu0
        %v601 = vpop.trf.xlu0
        %v602 = vpop.trf.xlu0
        %v603 = vpop.trf.xlu0
        %v604 = vpop.trf.xlu0
        %v605 = vpop.trf.xlu0
        %v606 = vpop.trf.xlu0
        %v607 = vpop.trf.xlu0
        %v608 = vpop.trf.xlu0
        %v609 = vpop.trf.xlu0
        %v610 = vpop.trf.xlu0
        %611 = vxpose.xlu0.b32.start [1/16] %v467, 128
        %612 = vxpose.xlu0.b32.cont [2/16] %v472, 128
        %613 = vxpose.xlu0.b32.cont [3/16] 0.0, 128
        %614 = vxpose.xlu0.b32.cont [4/16] 0.0, 128
        %615 = vxpose.xlu0.b32.cont [5/16] 0.0, 128
        %616 = vxpose.xlu0.b32.cont [6/16] 0.0, 128
        %617 = vxpose.xlu0.b32.cont [7/16] 0.0, 128
        %618 = vxpose.xlu0.b32.cont [8/16] 0.0, 128
        %619 = vxpose.xlu0.b32.cont [9/16] 0.0, 128
        %620 = vxpose.xlu0.b32.cont [10/16] 0.0, 128
        %621 = vxpose.xlu0.b32.cont [11/16] 0.0, 128
        %622 = vxpose.xlu0.b32.cont [12/16] 0.0, 128
        %623 = vxpose.xlu0.b32.cont [13/16] 0.0, 128
        %624 = vxpose.xlu0.b32.cont [14/16] 0.0, 128
        %625 = vxpose.xlu0.b32.cont [15/16] 0.0, 128
        %626 = vxpose.xlu0.b32.end [16/16] 0.0, 128
        %v627 = vpop.trf.xlu0
        %v628 = vpop.trf.xlu0
        %v629 = vpop.trf.xlu0
        %v630 = vpop.trf.xlu0
        %v631 = vpop.trf.xlu0
        %v632 = vpop.trf.xlu0
        %v633 = vpop.trf.xlu0
        %v634 = vpop.trf.xlu0
        %v635 = vpop.trf.xlu0
        %v636 = vpop.trf.xlu0
        %v637 = vpop.trf.xlu0
        %v638 = vpop.trf.xlu0
        %v639 = vpop.trf.xlu0
        %v640 = vpop.trf.xlu0
        %v641 = vpop.trf.xlu0
        %v642 = vpop.trf.xlu0
        %643 = vxpose.xlu0.b32.start [1/16] %v477, 128
        %644 = vxpose.xlu0.b32.cont [2/16] %v482, 128
        %645 = vxpose.xlu0.b32.cont [3/16] 0.0, 128
        %646 = vxpose.xlu0.b32.cont [4/16] 0.0, 128
        %647 = vxpose.xlu0.b32.cont [5/16] 0.0, 128
        %648 = vxpose.xlu0.b32.cont [6/16] 0.0, 128
        %649 = vxpose.xlu0.b32.cont [7/16] 0.0, 128
        %650 = vxpose.xlu0.b32.cont [8/16] 0.0, 128
        %651 = vxpose.xlu0.b32.cont [9/16] 0.0, 128
        %652 = vxpose.xlu0.b32.cont [10/16] 0.0, 128
        %653 = vxpose.xlu0.b32.cont [11/16] 0.0, 128
        %654 = vxpose.xlu0.b32.cont [12/16] 0.0, 128
        %655 = vxpose.xlu0.b32.cont [13/16] 0.0, 128
        %656 = vxpose.xlu0.b32.cont [14/16] 0.0, 128
        %657 = vxpose.xlu0.b32.cont [15/16] 0.0, 128
        %658 = vxpose.xlu0.b32.end [16/16] 0.0, 128
        %v659 = vpop.trf.xlu0
        %v660 = vpop.trf.xlu0
        %v661 = vpop.trf.xlu0
        %v662 = vpop.trf.xlu0
        %v663 = vpop.trf.xlu0
        %v664 = vpop.trf.xlu0
        %v665 = vpop.trf.xlu0
        %v666 = vpop.trf.xlu0
        %v667 = vpop.trf.xlu0
        %v668 = vpop.trf.xlu0
        %v669 = vpop.trf.xlu0
        %v670 = vpop.trf.xlu0
        %v671 = vpop.trf.xlu0
        %v672 = vpop.trf.xlu0
        %v673 = vpop.trf.xlu0
        %v674 = vpop.trf.xlu0
        %675 = vxpose.xlu0.b32.start [1/16] %v487, 128
        %676 = vxpose.xlu0.b32.cont [2/16] %v492, 128
        %677 = vxpose.xlu0.b32.cont [3/16] 0.0, 128
        %678 = vxpose.xlu0.b32.cont [4/16] 0.0, 128
        %679 = vxpose.xlu0.b32.cont [5/16] 0.0, 128
        %680 = vxpose.xlu0.b32.cont [6/16] 0.0, 128
        %681 = vxpose.xlu0.b32.cont [7/16] 0.0, 128
        %682 = vxpose.xlu0.b32.cont [8/16] 0.0, 128
        %683 = vxpose.xlu0.b32.cont [9/16] 0.0, 128
        %684 = vxpose.xlu0.b32.cont [10/16] 0.0, 128
        %685 = vxpose.xlu0.b32.cont [11/16] 0.0, 128
        %686 = vxpose.xlu0.b32.cont [12/16] 0.0, 128
        %687 = vxpose.xlu0.b32.cont [13/16] 0.0, 128
        %688 = vxpose.xlu0.b32.cont [14/16] 0.0, 128
        %689 = vxpose.xlu0.b32.cont [15/16] 0.0, 128
        %690 = vxpose.xlu0.b32.end [16/16] 0.0, 128
        %v691 = vpop.trf.xlu0
        %v692 = vpop.trf.xlu0
        %v693 = vpop.trf.xlu0
        %v694 = vpop.trf.xlu0
        %v695 = vpop.trf.xlu0
        %v696 = vpop.trf.xlu0
        %v697 = vpop.trf.xlu0
        %v698 = vpop.trf.xlu0
        %v699 = vpop.trf.xlu0
        %v700 = vpop.trf.xlu0
        %v701 = vpop.trf.xlu0
        %v702 = vpop.trf.xlu0
        %v703 = vpop.trf.xlu0
        %v704 = vpop.trf.xlu0
        %v705 = vpop.trf.xlu0
        %v706 = vpop.trf.xlu0
        %707 = vxpose.xlu0.b32.start [1/16] %v497, 128
        %708 = vxpose.xlu0.b32.cont [2/16] %v502, 128
        %709 = vxpose.xlu0.b32.cont [3/16] 0.0, 128
        %710 = vxpose.xlu0.b32.cont [4/16] 0.0, 128
        %711 = vxpose.xlu0.b32.cont [5/16] 0.0, 128
        %712 = vxpose.xlu0.b32.cont [6/16] 0.0, 128
        %713 = vxpose.xlu0.b32.cont [7/16] 0.0, 128
        %714 = vxpose.xlu0.b32.cont [8/16] 0.0, 128
        %715 = vxpose.xlu0.b32.cont [9/16] 0.0, 128
        %716 = vxpose.xlu0.b32.cont [10/16] 0.0, 128
        %717 = vxpose.xlu0.b32.cont [11/16] 0.0, 128
        %718 = vxpose.xlu0.b32.cont [12/16] 0.0, 128
        %719 = vxpose.xlu0.b32.cont [13/16] 0.0, 128
        %720 = vxpose.xlu0.b32.cont [14/16] 0.0, 128
        %721 = vxpose.xlu0.b32.cont [15/16] 0.0, 128
        %722 = vxpose.xlu0.b32.end [16/16] 0.0, 128
        %v723 = vpop.trf.xlu0
        %v724 = vpop.trf.xlu0
        %v725 = vpop.trf.xlu0
        %v726 = vpop.trf.xlu0
        %v727 = vpop.trf.xlu0
        %v728 = vpop.trf.xlu0
        %v729 = vpop.trf.xlu0
        %v730 = vpop.trf.xlu0
        %v731 = vpop.trf.xlu0
        %v732 = vpop.trf.xlu0
        %v733 = vpop.trf.xlu0
        %v734 = vpop.trf.xlu0
        %v735 = vpop.trf.xlu0
        %v736 = vpop.trf.xlu0
        %v737 = vpop.trf.xlu0
        %v738 = vpop.trf.xlu0
        %739 = vxpose.xlu0.b32.start [1/16] %v507, 128
        %740 = vxpose.xlu0.b32.cont [2/16] %v512, 128
        %741 = vxpose.xlu0.b32.cont [3/16] 0.0, 128
        %742 = vxpose.xlu0.b32.cont [4/16] 0.0, 128
        %743 = vxpose.xlu0.b32.cont [5/16] 0.0, 128
        %744 = vxpose.xlu0.b32.cont [6/16] 0.0, 128
        %745 = vxpose.xlu0.b32.cont [7/16] 0.0, 128
        %746 = vxpose.xlu0.b32.cont [8/16] 0.0, 128
        %747 = vxpose.xlu0.b32.cont [9/16] 0.0, 128
        %748 = vxpose.xlu0.b32.cont [10/16] 0.0, 128
        %749 = vxpose.xlu0.b32.cont [11/16] 0.0, 128
        %750 = vxpose.xlu0.b32.cont [12/16] 0.0, 128
        %751 = vxpose.xlu0.b32.cont [13/16] 0.0, 128
        %752 = vxpose.xlu0.b32.cont [14/16] 0.0, 128
        %753 = vxpose.xlu0.b32.cont [15/16] 0.0, 128
        %754 = vxpose.xlu0.b32.end [16/16] 0.0, 128
        %v755 = vpop.trf.xlu0
        %v756 = vpop.trf.xlu0
        %v757 = vpop.trf.xlu0
        %v758 = vpop.trf.xlu0
        %v759 = vpop.trf.xlu0
        %v760 = vpop.trf.xlu0
        %v761 = vpop.trf.xlu0
        %v762 = vpop.trf.xlu0
        %v763 = vpop.trf.xlu0
        %v764 = vpop.trf.xlu0
        %v765 = vpop.trf.xlu0
        %v766 = vpop.trf.xlu0
        %v767 = vpop.trf.xlu0
        %v768 = vpop.trf.xlu0
        %v769 = vpop.trf.xlu0
        %v770 = vpop.trf.xlu0
        %v771 = vsel %vm307, 16843009, 0
        %v772 = vsel %vm308, 16843009, 0
        %v773 = vsel %vm309, 16843009, 0
        %v774 = vsel %vm310, 16843009, 0
        %v775 = vsel %vm311, 16843009, 0
        %v776 = vsel %vm312, 16843009, 0
        %v777 = vsel %vm313, 16843009, 0
        %v778 = vsel %vm314, 16843009, 0
        %v779 = vunpack.c.0.s8 %v771
        %v780 = vunpack.c.0.s8 %v772
        %v781 = vunpack.c.0.s8 %v773
        %v782 = vunpack.c.0.s8 %v774
        %v783 = vunpack.c.0.s8 %v775
        %v784 = vunpack.c.0.s8 %v776
        %v785 = vunpack.c.0.s8 %v777
        %v786 = vunpack.c.0.s8 %v778
        %vm787 = vcmp.ne.s32.totalorder %v779, 0
        %vm788 = vcmp.ne.s32.totalorder %v780, 0
        %vm789 = vcmp.ne.s32.totalorder %v781, 0
        %vm790 = vcmp.ne.s32.totalorder %v782, 0
        %vm791 = vcmp.ne.s32.totalorder %v783, 0
        %vm792 = vcmp.ne.s32.totalorder %v784, 0
        %vm793 = vcmp.ne.s32.totalorder %v785, 0
        %vm794 = vcmp.ne.s32.totalorder %v786, 0
        %v795 = vsel %vm787, %v531, -9e+15
        %v796 = vsel %vm788, %v563, -9e+15
        %v797 = vsel %vm789, %v595, -9e+15
        %v798 = vsel %vm790, %v627, -9e+15
        %v799 = vsel %vm791, %v659, -9e+15
        %v800 = vsel %vm792, %v691, -9e+15
        %v801 = vsel %vm793, %v723, -9e+15
        %v802 = vsel %vm794, %v755, -9e+15
        %vm803 = vcmask 125952
        %v804 = vsel %vm803, %v795, -inf
        %805 = vmax.xlane.f32.xlu0 %v804
        %v806 = vpop.xlane.xlu0 %805
        %v807 = vsel %vm803, %v796, -inf
        %808 = vmax.xlane.f32.xlu0 %v807
        %v809 = vpop.xlane.xlu0 %808
        %v810 = vsel %vm803, %v797, -inf
        %811 = vmax.xlane.f32.xlu0 %v810
        %v812 = vpop.xlane.xlu0 %811
        %v813 = vsel %vm803, %v798, -inf
        %814 = vmax.xlane.f32.xlu0 %v813
        %v815 = vpop.xlane.xlu0 %814
        %v816 = vsel %vm803, %v799, -inf
        %817 = vmax.xlane.f32.xlu0 %v816
        %v818 = vpop.xlane.xlu0 %817
        %v819 = vsel %vm803, %v800, -inf
        %820 = vmax.xlane.f32.xlu0 %v819
        %v821 = vpop.xlane.xlu0 %820
        %v822 = vsel %vm803, %v801, -inf
        %823 = vmax.xlane.f32.xlu0 %v822
        %v824 = vpop.xlane.xlu0 %823
        %v825 = vsel %vm803, %v802, -inf
        %826 = vmax.xlane.f32.xlu0 %v825
        %v827 = vpop.xlane.xlu0 %826
        %v828 = vsub.f32 %v795, %v806
        %v829 = vsub.f32 %v796, %v809
        %v830 = vsub.f32 %v797, %v812
        %v831 = vsub.f32 %v798, %v815
        %v832 = vsub.f32 %v799, %v818
        %v833 = vsub.f32 %v800, %v821
        %v834 = vsub.f32 %v801, %v824
        %v835 = vsub.f32 %v802, %v827
        %v836 = vmul.f32 %v828, 1.442695
        %v837 = vpow.pop %v836
        %v838 = vmul.f32 %v829, 1.442695
        %v839 = vpow.pop %v838
        %v840 = vmul.f32 %v830, 1.442695
        %v841 = vpow.pop %v840
        %v842 = vmul.f32 %v831, 1.442695
        %v843 = vpow.pop %v842
        %v844 = vmul.f32 %v832, 1.442695
        %v845 = vpow.pop %v844
        %v846 = vmul.f32 %v833, 1.442695
        %v847 = vpow.pop %v846
        %v848 = vmul.f32 %v834, 1.442695
        %v849 = vpow.pop %v848
        %v850 = vmul.f32 %v835, 1.442695
        %v851 = vpow.pop %v850
        %v852 = vsel %vm803, %v837, 0.0
        %853 = vadd.xlane.f32.xlu0 %v852
        %v854 = vpop.xlane.xlu0 %853
        %v855 = vsel %vm803, %v839, 0.0
        %856 = vadd.xlane.f32.xlu0 %v855
        %v857 = vpop.xlane.xlu0 %856
        %v858 = vsel %vm803, %v841, 0.0
        %859 = vadd.xlane.f32.xlu0 %v858
        %v860 = vpop.xlane.xlu0 %859
        %v861 = vsel %vm803, %v843, 0.0
        %862 = vadd.xlane.f32.xlu0 %v861
        %v863 = vpop.xlane.xlu0 %862
        %v864 = vsel %vm803, %v845, 0.0
        %865 = vadd.xlane.f32.xlu0 %v864
        %v866 = vpop.xlane.xlu0 %865
        %v867 = vsel %vm803, %v847, 0.0
        %868 = vadd.xlane.f32.xlu0 %v867
        %v869 = vpop.xlane.xlu0 %868
        %v870 = vsel %vm803, %v849, 0.0
        %871 = vadd.xlane.f32.xlu0 %v870
        %v872 = vpop.xlane.xlu0 %871
        %v873 = vsel %vm803, %v851, 0.0
        %874 = vadd.xlane.f32.xlu0 %v873
        %v875 = vpop.xlane.xlu0 %874
        %v876 = vrcp.pop %v854
        %v877 = vmul.f32 %v837, %v876
        %v878 = vrcp.pop %v857
        %v879 = vmul.f32 %v839, %v878
        %v880 = vrcp.pop %v860
        %v881 = vmul.f32 %v841, %v880
        %v882 = vrcp.pop %v863
        %v883 = vmul.f32 %v843, %v882
        %v884 = vrcp.pop %v866
        %v885 = vmul.f32 %v845, %v884
        %v886 = vrcp.pop %v869
        %v887 = vmul.f32 %v847, %v886
        %v888 = vrcp.pop %v872
        %v889 = vmul.f32 %v849, %v888
        %v890 = vrcp.pop %v875
        %v891 = vmul.f32 %v851, %v890
        %892 = vst.msk [vmem:[%s268] sm:$0xf] %vm803, %v877
        %893 = vst.msk [vmem:[%s268 + $0x4] sm:$0xf] %vm803, %v879
        %894 = vst.msk [vmem:[%s268 + $0x8] sm:$0xf] %vm803, %v881
        %895 = vst.msk [vmem:[%s268 + $0xc] sm:$0xf] %vm803, %v883
        %896 = vst.msk [vmem:[%s268 + $0x10] sm:$0xf] %vm803, %v885
        %897 = vst.msk [vmem:[%s268 + $0x14] sm:$0xf] %vm803, %v887
        %898 = vst.msk [vmem:[%s268 + $0x18] sm:$0xf] %vm803, %v889
        %899 = vst.msk [vmem:[%s268 + $0x1c] sm:$0xf] %vm803, %v891
        %v900 = vsel %vm803, %v877, 0.0
        %v901 = vrot.slane %v900, 4
        %v902 = vadd.f32 %v900, %v901
        %v903 = vrot.slane %v902, 2
        %v904 = vadd.f32 %v902, %v903
        %v905 = vrot.slane %v904, 1
        %v906 = vadd.f32 %v904, %v905
        %v907 = vsel %vm803, %v879, 0.0
        %v908 = vrot.slane %v907, 4
        %v909 = vadd.f32 %v907, %v908
        %v910 = vrot.slane %v909, 2
        %v911 = vadd.f32 %v909, %v910
        %v912 = vrot.slane %v911, 1
        %v913 = vadd.f32 %v911, %v912
        %v914 = vsel %vm803, %v881, 0.0
        %v915 = vrot.slane %v914, 4
        %v916 = vadd.f32 %v914, %v915
        %v917 = vrot.slane %v916, 2
        %v918 = vadd.f32 %v916, %v917
        %v919 = vrot.slane %v918, 1
        %v920 = vadd.f32 %v918, %v919
        %v921 = vsel %vm803, %v883, 0.0
        %v922 = vrot.slane %v921, 4
        %v923 = vadd.f32 %v921, %v922
        %v924 = vrot.slane %v923, 2
        %v925 = vadd.f32 %v923, %v924
        %v926 = vrot.slane %v925, 1
        %v927 = vadd.f32 %v925, %v926
        %v928 = vsel %vm803, %v885, 0.0
        %v929 = vrot.slane %v928, 4
        %v930 = vadd.f32 %v928, %v929
        %v931 = vrot.slane %v930, 2
        %v932 = vadd.f32 %v930, %v931
        %v933 = vrot.slane %v932, 1
        %v934 = vadd.f32 %v932, %v933
        %v935 = vsel %vm803, %v887, 0.0
        %v936 = vrot.slane %v935, 4
        %v937 = vadd.f32 %v935, %v936
        %v938 = vrot.slane %v937, 2
        %v939 = vadd.f32 %v937, %v938
        %v940 = vrot.slane %v939, 1
        %v941 = vadd.f32 %v939, %v940
        %v942 = vsel %vm803, %v889, 0.0
        %v943 = vrot.slane %v942, 4
        %v944 = vadd.f32 %v942, %v943
        %v945 = vrot.slane %v944, 2
        %v946 = vadd.f32 %v944, %v945
        %v947 = vrot.slane %v946, 1
        %v948 = vadd.f32 %v946, %v947
        %v949 = vsel %vm803, %v891, 0.0
        %v950 = vrot.slane %v949, 4
        %v951 = vadd.f32 %v949, %v950
        %v952 = vrot.slane %v951, 2
        %v953 = vadd.f32 %v951, %v952
        %v954 = vrot.slane %v953, 1
        %v955 = vadd.f32 %v953, %v954
        %957 = vbcast.lane.b32.xlu0 %v906, 256
        %v958 = vpop.permute.xlu0 %957
        %s960 = sor.u32 256, 8
        %961 = vbcast.lane.b32.xlu0 %v906, %s960
        %v962 = vpop.permute.xlu0 %961
        %964 = vbcast.lane.b32.xlu0 %v913, 256
        %v965 = vpop.permute.xlu0 %964
        %s967 = sor.u32 256, 8
        %968 = vbcast.lane.b32.xlu0 %v913, %s967
        %v969 = vpop.permute.xlu0 %968
        %971 = vbcast.lane.b32.xlu0 %v920, 256
        %v972 = vpop.permute.xlu0 %971
        %s974 = sor.u32 256, 8
        %975 = vbcast.lane.b32.xlu0 %v920, %s974
        %v976 = vpop.permute.xlu0 %975
        %978 = vbcast.lane.b32.xlu0 %v927, 256
        %v979 = vpop.permute.xlu0 %978
        %s981 = sor.u32 256, 8
        %982 = vbcast.lane.b32.xlu0 %v927, %s981
        %v983 = vpop.permute.xlu0 %982
        %985 = vbcast.lane.b32.xlu0 %v934, 256
        %v986 = vpop.permute.xlu0 %985
        %s988 = sor.u32 256, 8
        %989 = vbcast.lane.b32.xlu0 %v934, %s988
        %v990 = vpop.permute.xlu0 %989
        %992 = vbcast.lane.b32.xlu0 %v941, 256
        %v993 = vpop.permute.xlu0 %992
        %s995 = sor.u32 256, 8
        %996 = vbcast.lane.b32.xlu0 %v941, %s995
        %v997 = vpop.permute.xlu0 %996
        %999 = vbcast.lane.b32.xlu0 %v948, 256
        %v1000 = vpop.permute.xlu0 %999
        %s1002 = sor.u32 256, 8
        %1003 = vbcast.lane.b32.xlu0 %v948, %s1002
        %v1004 = vpop.permute.xlu0 %1003
        %1006 = vbcast.lane.b32.xlu0 %v955, 256
        %v1007 = vpop.permute.xlu0 %1006
        %s1009 = sor.u32 256, 8
        %1010 = vbcast.lane.b32.xlu0 %v955, %s1009
        %v1011 = vpop.permute.xlu0 %1010
        %v1012 = vmul.f32 %v958, %v278
        %v1013 = vmul.f32 %v962, %v279
        %v1014 = vmul.f32 %v965, %v280
        %v1015 = vmul.f32 %v969, %v281
        %v1016 = vmul.f32 %v972, %v282
        %v1017 = vmul.f32 %v976, %v283
        %v1018 = vmul.f32 %v979, %v284
        %v1019 = vmul.f32 %v983, %v285
        %v1020 = vmul.f32 %v986, %v286
        %v1021 = vmul.f32 %v990, %v287
        %v1022 = vmul.f32 %v993, %v288
        %v1023 = vmul.f32 %v997, %v289
        %v1024 = vmul.f32 %v1000, %v290
        %v1025 = vmul.f32 %v1004, %v291
        %v1026 = vmul.f32 %v1007, %v292
        %v1027 = vmul.f32 %v1011, %v293
        %v1028 = vsel %vm321, %v1012, 0.0
        %v1029 = vsel %vm321, %v1013, 0.0
        %v1030 = vadd.f32 %v1028, %v1029
        %v1031 = vrot.slane %v1030, 4
        %v1032 = vadd.f32 %v1030, %v1031
        %v1033 = vrot.slane %v1032, 2
        %v1034 = vadd.f32 %v1032, %v1033
        %v1035 = vrot.slane %v1034, 1
        %v1036 = vadd.f32 %v1034, %v1035
        %v1037 = vsel %vm321, %v1014, 0.0
        %v1038 = vsel %vm321, %v1015, 0.0
        %v1039 = vadd.f32 %v1037, %v1038
        %v1040 = vrot.slane %v1039, 4
        %v1041 = vadd.f32 %v1039, %v1040
        %v1042 = vrot.slane %v1041, 2
        %v1043 = vadd.f32 %v1041, %v1042
        %v1044 = vrot.slane %v1043, 1
        %v1045 = vadd.f32 %v1043, %v1044
        %v1046 = vsel %vm321, %v1016, 0.0
        %v1047 = vsel %vm321, %v1017, 0.0
        %v1048 = vadd.f32 %v1046, %v1047
        %v1049 = vrot.slane %v1048, 4
        %v1050 = vadd.f32 %v1048, %v1049
        %v1051 = vrot.slane %v1050, 2
        %v1052 = vadd.f32 %v1050, %v1051
        %v1053 = vrot.slane %v1052, 1
        %v1054 = vadd.f32 %v1052, %v1053
        %v1055 = vsel %vm321, %v1018, 0.0
        %v1056 = vsel %vm321, %v1019, 0.0
        %v1057 = vadd.f32 %v1055, %v1056
        %v1058 = vrot.slane %v1057, 4
        %v1059 = vadd.f32 %v1057, %v1058
        %v1060 = vrot.slane %v1059, 2
        %v1061 = vadd.f32 %v1059, %v1060
        %v1062 = vrot.slane %v1061, 1
        %v1063 = vadd.f32 %v1061, %v1062
        %v1064 = vsel %vm321, %v1020, 0.0
        %v1065 = vsel %vm321, %v1021, 0.0
        %v1066 = vadd.f32 %v1064, %v1065
        %v1067 = vrot.slane %v1066, 4
        %v1068 = vadd.f32 %v1066, %v1067
        %v1069 = vrot.slane %v1068, 2
        %v1070 = vadd.f32 %v1068, %v1069
        %v1071 = vrot.slane %v1070, 1
        %v1072 = vadd.f32 %v1070, %v1071
        %v1073 = vsel %vm321, %v1022, 0.0
        %v1074 = vsel %vm321, %v1023, 0.0
        %v1075 = vadd.f32 %v1073, %v1074
        %v1076 = vrot.slane %v1075, 4
        %v1077 = vadd.f32 %v1075, %v1076
        %v1078 = vrot.slane %v1077, 2
        %v1079 = vadd.f32 %v1077, %v1078
        %v1080 = vrot.slane %v1079, 1
        %v1081 = vadd.f32 %v1079, %v1080
        %v1082 = vsel %vm321, %v1024, 0.0
        %v1083 = vsel %vm321, %v1025, 0.0
        %v1084 = vadd.f32 %v1082, %v1083
        %v1085 = vrot.slane %v1084, 4
        %v1086 = vadd.f32 %v1084, %v1085
        %v1087 = vrot.slane %v1086, 2
        %v1088 = vadd.f32 %v1086, %v1087
        %v1089 = vrot.slane %v1088, 1
        %v1090 = vadd.f32 %v1088, %v1089
        %v1091 = vsel %vm321, %v1026, 0.0
        %v1092 = vsel %vm321, %v1027, 0.0
        %v1093 = vadd.f32 %v1091, %v1092
        %v1094 = vrot.slane %v1093, 4
        %v1095 = vadd.f32 %v1093, %v1094
        %v1096 = vrot.slane %v1095, 2
        %v1097 = vadd.f32 %v1095, %v1096
        %v1098 = vrot.slane %v1097, 1
        %v1099 = vadd.f32 %v1097, %v1098
        %vm1108 = vcmask 1041409
        %v1109 = vsel %vm1108, %v1045, %v1036
        %vm1110 = vcmask 1042434
        %v1111 = vsel %vm1110, %v1054, %v1109
        %vm1112 = vcmask 1043459
        %v1113 = vsel %vm1112, %v1063, %v1111
        %vm1114 = vcmask 1044484
        %v1115 = vsel %vm1114, %v1072, %v1113
        %vm1116 = vcmask 1045509
        %v1117 = vsel %vm1116, %v1081, %v1115
        %vm1118 = vcmask 1046534
        %v1119 = vsel %vm1118, %v1090, %v1117
        %vm1120 = vcmask 1047559
        %v1121 = vsel %vm1120, %v1099, %v1119
        %1123 = vst.msk [vmem:[%s261] sm:$0xff] %vm321, %v1121
        %s1124 = sand.u32 %s128, 1
        %s1125 = scalar_lea.sflag [#allocation4], %s1124
        %s1126 = sand.u32 %s128, 1
        %s1127 = smul.addr %s1126, 8
        %s1128 = scalar_lea.vmem [#allocation5], %s1127
        %s1129 = sand.u32 %s154, 1
        %s1130 = scalar_lea.sflag [#allocation7], %s1129
        %s1131 = sand.u32 %s154, 1
        %s1132 = smul.addr %s1131, 32
        %s1133 = scalar_lea.vmem [#allocation6], %s1132
        // Predicated region
        $region41: #{tpu_custom_call.1} parent=35 // pred_check
          %p1134 = pneg %p138
        $region42: #{tpu_custom_call.1} parent=35 // pred_check_branch
          %1136 = sbr.rel (%p1134) target = $region44
        $region43: #{tpu_custom_call.1} parent=35 // pred_region
          %s1138 = ssub.s32 128, 128
          %1139 = vsyncadd %s1125, %s1138
          %s1140 = smul.addr %s26, 128
          %s1141 = scalar_lea.hbm %s4, %s1140
          %s1143 = sshll.u32 %s1128, 4
          %s1144 = int_to_ptr.vmem [resolvable:$true] %s1143
          %1146 = dma.vmem_to_hbm [thread:$0]  %s1144, 128, %s1141, %s1125
        $region44: #{tpu_custom_call.1} parent=35 // pred_fallthru
          _
        // Predicated region
        $region45: #{tpu_custom_call.1} parent=35 // pred_check
          %p1147 = pneg %p164
        $region46: #{tpu_custom_call.1} parent=35 // pred_check_branch
          %1149 = sbr.rel (%p1147) target = $region48
        $region47: #{tpu_custom_call.1} parent=35 // pred_region
          %s1150 = smul.u32 8, %s26
          %s1152 = ssub.s32 512, 512
          %1153 = vsyncadd %s1130, %s1152
          %s1154 = smul.addr %s1150, 64
          %s1155 = scalar_lea.hbm %s5, %s1154
          %s1156 = sshll.u32 %s1133, 4
          %s1157 = int_to_ptr.vmem [resolvable:$true] %s1156
          %1162 = dma.vmem_to_hbm [thread:$0]  %s1157, 512, %s1155, %s1130, 64, 64, 4
        $region48: #{tpu_custom_call.1} parent=35 // pred_fallthru
          _
      $region36: #{tpu_custom_call.1} parent=5 // pred_fallthru
        _
      %p1163 = scmp.le.s32.totalorder 2, %s21
      // Predicated region
      $region49: #{tpu_custom_call.1} parent=5 // pred_check
        %p1164 = pneg %p1163
      $region50: #{tpu_custom_call.1} parent=5 // pred_check_branch
        %1166 = sbr.rel (%p1164) target = $region52
      $region51: #{tpu_custom_call.1} parent=5 // pred_region
        %s1167 = ssub.s32 %s21, 2
        // Predicated region
        $region53: #{tpu_custom_call.1} parent=51 // pred_check
          %p1168 = pneg %p144
        $region54: #{tpu_custom_call.1} parent=51 // pred_check_branch
          %1170 = sbr.rel (%p1168) target = $region56
        $region55: #{tpu_custom_call.1} parent=51 // pred_region
          %s1171 = sand.u32 %s129, 1
          %s1172 = scalar_lea.sflag [#allocation4], %s1171
          %s1173 = sand.u32 %s129, 1
          %s1174 = smul.addr %s1173, 8
          %s1175 = scalar_lea.vmem [#allocation5], %s1174
          %1176 = dma.done %s1172, 128
        $region56: #{tpu_custom_call.1} parent=51 // pred_fallthru
          _
        // Predicated region
        $region57: #{tpu_custom_call.1} parent=51 // pred_check
          %p1177 = pneg %p170
        $region58: #{tpu_custom_call.1} parent=51 // pred_check_branch
          %1179 = sbr.rel (%p1177) target = $region60
        $region59: #{tpu_custom_call.1} parent=51 // pred_region
          %s1180 = sand.u32 %s155, 1
          %s1181 = scalar_lea.sflag [#allocation7], %s1180
          %s1182 = sand.u32 %s155, 1
          %s1183 = smul.addr %s1182, 32
          %s1184 = scalar_lea.vmem [#allocation6], %s1183
          %1185 = dma.done %s1181, 512
        $region60: #{tpu_custom_call.1} parent=51 // pred_fallthru
          _
      $region52: #{tpu_custom_call.1} parent=5 // pred_fallthru
        _
    $region6: #{tpu_custom_call.1} parent=1 // loop_footer
      %s25 = sadd.s32 1, %s21
    $region7: #{tpu_custom_call.1} parent=1 // loop_footer_branch
      %20 = sbr.rel target = $region3
    $region8: #{tpu_custom_call.1} parent=1 // loop_exit
      _
    %1186 = vsyncpa [#allocation3], 1
    %s1187 = scalar_lea.sflag [#allocation3], 1
    %1188 = vsyncpa %s1187, 1
    %1189 = vsyncpa [#allocation4], 1
    %s1190 = scalar_lea.sflag [#allocation4], 1
    %1191 = vsyncpa %s1190, 1
    %1192 = vsyncpa [#allocation7], 1
    %s1193 = scalar_lea.sflag [#allocation7], 1
    %1194 = vsyncpa %s1193, 1

</llo_original>
